<compile_context>
chip_gen: v6e
topology: v6e:2x2x1
jax: 0.10.0
libtpu: 0.0.40
codegen_flags: <defaults>
</compile_context>

<pallas_src>
import functools
import math

import jax
import jax.numpy as jnp
from jax.experimental import pallas as pl
from jax.experimental.pallas import tpu as pltpu


COMPUTE_DTYPE = jnp.bfloat16   # MXU operand dtype; accumulation / norm math in f32.


def _tpu_vmem_capacity_bytes():
    try:
        return int(pltpu.get_tpu_info().vmem_capacity_bytes)
    except Exception:
        return 64 * 1024 * 1024        # conservative fallback (v7x per-TC VMEM)


_VMEM_CAP = _tpu_vmem_capacity_bytes()
# Above the 16/32 MiB default scoped limits, comfortably below physical on every gen.
_VMEM_LIMIT = int(min(96 * 1024 * 1024, _VMEM_CAP * 3 // 4))
# 128 MiB chips (v5e/v6e) can afford bigger M tiles; 64 MiB (v7x) keeps 512.
_DEFAULT_TM = 1024 if _VMEM_CAP >= (100 << 20) else 512


def _mosaic_params(*semantics):
    return pltpu.CompilerParams(dimension_semantics=semantics,
                                vmem_limit_bytes=_VMEM_LIMIT)


def _const_spec(shape):
    """BlockSpec for a grid-invariant operand; single-buffered (no double-buffer)."""
    index_map = lambda i: (0,) * len(shape)
    try:
        return pl.BlockSpec(shape, index_map, pipeline_mode=pl.Buffered(1))
    except TypeError:  # older jax without pipeline_mode on BlockSpec
        return pl.BlockSpec(shape, index_map)


# ----------------------------- Pallas kernels -----------------------------

def _gelu_f32(y):
    # TODO(synk): HF BERT uses exact (erf-based) GELU; tanh approximation used here.
    c = math.sqrt(2.0 / math.pi)
    return 0.5 * y * (1.0 + jnp.tanh(c * (y + 0.044715 * y * y * y)))


def _linear_kernel(x_ref, w_ref, b_ref, o_ref, *, activation):
    # bf16 operands on the MXU, f32 accumulator.
    y = jnp.dot(x_ref[...], w_ref[...], preferred_element_type=jnp.float32)
    y = y + b_ref[...].astype(jnp.float32)
    if activation == "gelu":
        y = _gelu_f32(y)
    o_ref[...] = y.astype(o_ref.dtype)


def linear(x, w, b, activation=None, tm=_DEFAULT_TM):
    """y = act(x @ w + b), tiled over M; weight resident (single-buffered)."""
    M, K = x.shape
    N = w.shape[1]
    tm = min(tm, M)
    grid_m = pl.cdiv(M, tm)
    cost = pl.CostEstimate(
        flops=2 * M * K * N,
        transcendentals=(M * N if activation == "gelu" else 0),
        bytes_accessed=x.dtype.itemsize * (M * K + M * N)
        + w.dtype.itemsize * K * N + b.dtype.itemsize * N,
    )
    return pl.pallas_call(
        functools.partial(_linear_kernel, activation=activation),
        out_shape=jax.ShapeDtypeStruct((M, N), x.dtype),
        grid=(grid_m,),
        in_specs=[
            pl.BlockSpec((tm, K), lambda i: (i, 0)),
            _const_spec((K, N)),          # resident weight, not double-buffered
            _const_spec((1, N)),
        ],
        out_specs=pl.BlockSpec((tm, N), lambda i: (i, 0)),
        compiler_params=_mosaic_params("parallel"),
        cost_estimate=cost,
    )(x, w, b.reshape(1, N))


def _linear_residual_ln_kernel(x_ref, w_ref, b_ref, res_ref, g_ref, beta_ref,
                               o_ref, *, eps):
    # Fused: (x @ w + b + residual) -> LayerNorm -> single lane-dense store.
    y = jnp.dot(x_ref[...], w_ref[...], preferred_element_type=jnp.float32)
    y = y + b_ref[...].astype(jnp.float32) + res_ref[...].astype(jnp.float32)
    mean = jnp.mean(y, axis=-1, keepdims=True)
    var = jnp.mean((y - mean) ** 2, axis=-1, keepdims=True)
    y = (y - mean) * jax.lax.rsqrt(var + eps)
    y = y * g_ref[...].astype(jnp.float32) + beta_ref[...].astype(jnp.float32)
    o_ref[...] = y.astype(o_ref.dtype)


def linear_residual_layernorm(x, w, b, res, gamma, beta, eps=1e-12, tm=_DEFAULT_TM):
    M, K = x.shape
    N = w.shape[1]
    tm = min(tm, M)
    grid_m = pl.cdiv(M, tm)
    cost = pl.CostEstimate(
        flops=2 * M * K * N + 8 * M * N,
        transcendentals=M,                       # rsqrt per row
        bytes_accessed=x.dtype.itemsize * (M * K + 2 * M * N)
        + w.dtype.itemsize * K * N + gamma.dtype.itemsize * 3 * N,
    )
    return pl.pallas_call(
        functools.partial(_linear_residual_ln_kernel, eps=eps),
        out_shape=jax.ShapeDtypeStruct((M, N), x.dtype),
        grid=(grid_m,),
        in_specs=[
            pl.BlockSpec((tm, K), lambda i: (i, 0)),
            _const_spec((K, N)),                  # resident weight
            _const_spec((1, N)),
            pl.BlockSpec((tm, N), lambda i: (i, 0)),  # residual tile
            _const_spec((1, N)),
            _const_spec((1, N)),
        ],
        out_specs=pl.BlockSpec((tm, N), lambda i: (i, 0)),
        compiler_params=_mosaic_params("parallel"),
        cost_estimate=cost,
    )(x, w, b.reshape(1, N), res, gamma.reshape(1, N), beta.reshape(1, N))


def _layernorm_kernel(x_ref, g_ref, b_ref, o_ref, *, eps):
    x = x_ref[...].astype(jnp.float32)
    mean = jnp.mean(x, axis=-1, keepdims=True)
    var = jnp.mean((x - mean) ** 2, axis=-1, keepdims=True)
    y = (x - mean) * jax.lax.rsqrt(var + eps)
    y = y * g_ref[...].astype(jnp.float32) + b_ref[...].astype(jnp.float32)
    o_ref[...] = y.astype(o_ref.dtype)


def layernorm(x, gamma, beta, eps=1e-12, tm=_DEFAULT_TM):
    M, H = x.shape
    tm = min(tm, M)
    grid_m = pl.cdiv(M, tm)
    return pl.pallas_call(
        functools.partial(_layernorm_kernel, eps=eps),
        out_shape=jax.ShapeDtypeStruct((M, H), x.dtype),
        grid=(grid_m,),
        in_specs=[
            pl.BlockSpec((tm, H), lambda i: (i, 0)),
            _const_spec((1, H)),
            _const_spec((1, H)),
        ],
        out_specs=pl.BlockSpec((tm, H), lambda i: (i, 0)),
        compiler_params=_mosaic_params("parallel"),
    )(x, gamma.reshape(1, H), beta.reshape(1, H))


def _attention_kernel(bias_ref, qkv_ref, o_ref, *, num_heads, hidden, scale):
    # One program per batch row. Heads are sliced from the lane-dense [S, 3H] slab;
    # each head's context is written straight into its o_ref slice (no concatenate,
    # no per-head temporaries kept live past the head iteration).
    # TODO(synk): flash-style KV-tiled online softmax for S >= 512 (v7x VMEM), and a
    # head-batched layout so QK^T contraction depth / P@V width reach 128 lanes.
    qkv = qkv_ref[...]                                   # (S, 3H), native (bf16) dtype
    bias = bias_ref[...].astype(jnp.float32)             # (1, S) additive mask
    dh = hidden // num_heads
    for h in range(num_heads):
        # 1/sqrt(dh) folded into Q: S*dh multiplies instead of S*S.
        q = qkv[:, h * dh:(h + 1) * dh] * scale
        k = qkv[:, hidden + h * dh:hidden + (h + 1) * dh]
        v = qkv[:, 2 * hidden + h * dh:2 * hidden + (h + 1) * dh]
        # Contract last axes of both operands: feeds the MXU with no XLU transpose.
        s = jax.lax.dot_general(q, k, (((1,), (1,)), ((), ())),
                                preferred_element_type=jnp.float32) + bias
        m = jnp.max(s, axis=-1, keepdims=True)
        p = jnp.exp(s - m)
        p = p * pl.reciprocal(jnp.sum(p, axis=-1, keepdims=True), approx=True)
        ctx = jnp.dot(p.astype(qkv.dtype), v, preferred_element_type=jnp.float32)
        o_ref[:, h * dh:(h + 1) * dh] = ctx.astype(o_ref.dtype)


def attention(qkv, mask_bias, num_heads):
    """qkv: (B, S, 3H) fused projections; mask_bias: (B, S) additive mask (f32)."""
    B, S, H3 = qkv.shape
    H = H3 // 3
    dh = H // num_heads
    scale = 1.0 / math.sqrt(dh)
    bias3 = mask_bias.reshape(B, 1, S)
    cost = pl.CostEstimate(
        flops=4 * B * S * S * H,
        transcendentals=B * num_heads * S * S,
        bytes_accessed=qkv.dtype.itemsize * (B * S * H3 + B * S * H) + 4 * B * S,
    )
    return pl.pallas_call(
        functools.partial(_attention_kernel, num_heads=num_heads, hidden=H,
                          scale=scale),
        out_shape=jax.ShapeDtypeStruct((B, S, H), qkv.dtype),
        grid=(B,),
        in_specs=[
            pl.BlockSpec((None, 1, S), lambda b: (b, 0, 0)),
            pl.BlockSpec((None, S, H3), lambda b: (b, 0, 0)),
        ],
        out_specs=pl.BlockSpec((None, S, H), lambda b: (b, 0, 0)),
        compiler_params=_mosaic_params("parallel"),
        cost_estimate=cost,
    )(bias3, qkv)


def _mean_pool_kernel(x_ref, m_ref, o_ref):
    x = x_ref[...].astype(jnp.float32)        # (tb, S, H)
    m = m_ref[...].astype(jnp.float32)        # (tb, S) lane-dense mask
    s = jnp.sum(x * m[:, :, None], axis=1)    # masked sum over S -> (tb, H)
    denom = jnp.maximum(jnp.sum(m, axis=1, keepdims=True), 1e-9)  # clamp(min=1e-9)
    o_ref[...] = (s / denom).astype(o_ref.dtype)


def mean_pooling(token_embeddings, attention_mask, tb=8):
    """Masked mean over the sequence axis, tiled over batch. Output is f32."""
    B, S, H = token_embeddings.shape
    tb = min(tb, B)
    grid_b = pl.cdiv(B, tb)
    mask = attention_mask.astype(jnp.float32)          # (B, S), no width-1 block
    return pl.pallas_call(
        _mean_pool_kernel,
        out_shape=jax.ShapeDtypeStruct((B, H), jnp.float32),
        grid=(grid_b,),
        in_specs=[
            pl.BlockSpec((tb, S, H), lambda i: (i, 0, 0)),
            pl.BlockSpec((tb, S), lambda i: (i, 0)),
        ],
        out_specs=pl.BlockSpec((tb, H), lambda i: (i, 0)),
        compiler_params=_mosaic_params("parallel"),
    )(token_embeddings, mask)


# ----------------------------- Model glue (plain JAX) -----------------------------

def bert_layer(p, x, mask_bias, num_heads):
    B, S, H = x.shape
    xf = x.reshape(B * S, H)

    # Fused Q/K/V projection: one [H, 3H] matmul, one pallas_call.
    qkv = linear(xf, p["qkv_w"], p["qkv_b"])                          # (B*S, 3H)
    ctx = attention(qkv.reshape(B, S, 3 * H), mask_bias, num_heads)   # (B, S, H)

    # attention-output linear + residual + LayerNorm (fused epilogue)
    x1 = linear_residual_layernorm(ctx.reshape(B * S, H), p["ao_w"], p["ao_b"],
                                   xf, p["ln1_g"], p["ln1_b"])
    # FFN: intermediate linear with fused GELU, then output linear + residual + LN
    inter = linear(x1, p["i_w"], p["i_b"], activation="gelu")
    x2 = linear_residual_layernorm(inter, p["fo_w"], p["fo_b"],
                                   x1, p["ln2_g"], p["ln2_b"])
    return x2.reshape(B, S, H)


def bert_encode(params, input_ids, attention_mask, cfg):
    B, S = input_ids.shape
    H = cfg["hidden_size"]
    # TODO(synk): embedding lookup is a gather; left to XLA outside Pallas.
    we = jnp.take(params["word_emb"], input_ids, axis=0)              # bf16
    pe = params["pos_emb"][:S][None, :, :]
    te = params["type_emb"][0][None, None, :]                         # token_type_ids == 0
    x = (we + pe + te).astype(COMPUTE_DTYPE)
    x = layernorm(x.reshape(B * S, H), params["emb_ln_g"],
                  params["emb_ln_b"]).reshape(B, S, H)
    mask_bias = (1.0 - attention_mask.astype(jnp.float32)) * -10000.0  # HF additive mask
    for lp in params["layers"]:
        x = bert_layer(lp, x, mask_bias, cfg["num_heads"])
    return x


def sentence_bert_forward(params, cfg, p_ids, p_mask, h_ids, h_mask):
    p_out = bert_encode(params, p_ids, p_mask, cfg)
    h_out = bert_encode(params, h_ids, h_mask, cfg)
    p_emb = mean_pooling(p_out, p_mask)                               # f32
    h_emb = mean_pooling(h_out, h_mask)                               # f32
    features = jnp.concatenate([p_emb, h_emb, jnp.abs(p_emb - h_emb)], axis=1)
    # Final 3-class classifier in plain XLA: N=3 output would force masked partial
    # stores and near-empty MXU passes; negligible FLOPs.
    return jnp.dot(features, params["fc_w"]) + params["fc_b"]         # (B, 3) f32


# ----------------------------- Deterministic params -----------------------------

def init_params(key, cfg):
    H, I = cfg["hidden_size"], cfg["intermediate_size"]
    V, P, L = cfg["vocab_size"], cfg["max_position"], cfg["num_layers"]
    keys = iter(jax.random.split(key, 8 + 8 * L))

    def nrm(shape, dtype=COMPUTE_DTYPE):
        return (0.02 * jax.random.normal(next(keys), shape, dtype=jnp.float32)
                ).astype(dtype)

    params = {
        "word_emb": nrm((V, H)),
        "pos_emb": nrm((P, H)),
        "type_emb": nrm((2, H)),
        "emb_ln_g": jnp.ones((H,), jnp.float32),
        "emb_ln_b": jnp.zeros((H,), jnp.float32),
        "fc_w": nrm((3 * H, 3), jnp.float32),         # classifier stays f32 (XLA)
        "fc_b": jnp.zeros((3,), jnp.float32),
        "layers": [],
    }
    for _ in range(L):
        params["layers"].append({
            # fused Q|K|V weight: [H, 3H] (equivalent to three separate [H, H] mats)
            "qkv_w": nrm((H, 3 * H)), "qkv_b": jnp.zeros((3 * H,), jnp.float32),
            "ao_w": nrm((H, H)), "ao_b": jnp.zeros((H,), jnp.float32),
            "ln1_g": jnp.ones((H,), jnp.float32), "ln1_b": jnp.zeros((H,), jnp.float32),
            "i_w": nrm((H, I)), "i_b": jnp.zeros((I,), jnp.float32),
            "fo_w": nrm((I, H)), "fo_b": jnp.zeros((H,), jnp.float32),
            "ln2_g": jnp.ones((H,), jnp.float32), "ln2_b": jnp.zeros((H,), jnp.float32),
        })
    return params


if __name__ == "__main__":
    cfg = dict(vocab_size=50, hidden_size=32, num_heads=4, num_layers=2,
               intermediate_size=64, max_position=16)
    key = jax.random.PRNGKey(0)
    pkey, ikey1, ikey2 = jax.random.split(key, 3)
    params = init_params(pkey, cfg)

    B, S = 2, 8
    premise_input_ids = jax.random.randint(ikey1, (B, S), 0, cfg["vocab_size"], dtype=jnp.int32)
    hypothesis_input_ids = jax.random.randint(ikey2, (B, S), 0, cfg["vocab_size"], dtype=jnp.int32)
    premise_attention_mask = jnp.array([[1] * 8, [1] * 6 + [0] * 2], dtype=jnp.int32)
    hypothesis_attention_mask = jnp.array([[1] * 7 + [0], [1] * 8], dtype=jnp.int32)

    logits = sentence_bert_forward(params, cfg,
                                   premise_input_ids, premise_attention_mask,
                                   hypothesis_input_ids, hypothesis_attention_mask)
    jax.block_until_ready(logits)
    assert logits.shape == (B, 3) and logits.dtype == jnp.float32
    print("KERNEL_OK")
</pallas_src>

<mosaic_0001>
module attributes {stable_mosaic.version = 11 : i64} {
  func.func @_layernorm_kernel(%arg0: i32, %arg1: memref<16x32xbf16, #tpu.memory_space<vmem>>, %arg2: memref<1x32xf32, #tpu.memory_space<vmem>>, %arg3: memref<1x32xf32, #tpu.memory_space<vmem>>, %arg4: memref<16x32xbf16, #tpu.memory_space<vmem>>) attributes {dimension_semantics = [#tpu.dimension_semantics<parallel>], iteration_bounds = array<i64: 1>, scalar_prefetch = 0 : i64, scratch_operands = 0 : i64, tpu.core_type = #tpu.core_type<tc>, window_params = [{transform_indices = @transform_0, window_bounds = array<i64: 16, 32>}, {pipeline_mode = #tpu.pipeline_mode<synchronous>, transform_indices = @transform_1, window_bounds = array<i64: 1, 32>}, {pipeline_mode = #tpu.pipeline_mode<synchronous>, transform_indices = @transform_2, window_bounds = array<i64: 1, 32>}, {transform_indices = @transform_3, window_bounds = array<i64: 16, 32>}]} {
    %c0 = arith.constant 0 : index
    %c0_0 = arith.constant 0 : index
    %0 = vector.load %arg1[%c0, %c0_0] : memref<16x32xbf16, #tpu.memory_space<vmem>>, vector<16x32xbf16>
    %1 = arith.extf %0 : vector<16x32xbf16> to vector<16x32xf32>
    %cst = arith.constant dense<0.000000e+00> : vector<16xf32>
    %2 = vector.multi_reduction <add>, %1, %cst [1] : vector<16x32xf32> to vector<16xf32>
    %3 = vector.shape_cast %2 : vector<16xf32> to vector<16x1xf32>
    %cst_1 = arith.constant 3.200000e+01 : f32
    %4 = vector.broadcast %cst_1 : f32 to vector<16x1xf32>
    %5 = arith.divf %3, %4 : vector<16x1xf32>
    %6 = vector.broadcast %5 : vector<16x1xf32> to vector<16x32xf32>
    %7 = arith.subf %1, %6 : vector<16x32xf32>
    %8 = arith.mulf %7, %7 : vector<16x32xf32>
    %cst_2 = arith.constant dense<0.000000e+00> : vector<16xf32>
    %9 = vector.multi_reduction <add>, %8, %cst_2 [1] : vector<16x32xf32> to vector<16xf32>
    %10 = vector.shape_cast %9 : vector<16xf32> to vector<16x1xf32>
    %cst_3 = arith.constant 3.200000e+01 : f32
    %11 = vector.broadcast %cst_3 : f32 to vector<16x1xf32>
    %12 = arith.divf %10, %11 : vector<16x1xf32>
    %13 = vector.broadcast %5 : vector<16x1xf32> to vector<16x32xf32>
    %14 = arith.subf %1, %13 : vector<16x32xf32>
    %cst_4 = arith.constant 9.99999996E-13 : f32
    %15 = vector.broadcast %cst_4 : f32 to vector<16x1xf32>
    %16 = arith.addf %12, %15 : vector<16x1xf32>
    %17 = math.rsqrt %16 : vector<16x1xf32>
    %18 = vector.broadcast %17 : vector<16x1xf32> to vector<16x32xf32>
    %19 = arith.mulf %14, %18 : vector<16x32xf32>
    %c0_5 = arith.constant 0 : index
    %c0_6 = arith.constant 0 : index
    %20 = vector.load %arg2[%c0_5, %c0_6] : memref<1x32xf32, #tpu.memory_space<vmem>>, vector<1x32xf32>
    %21 = vector.broadcast %20 : vector<1x32xf32> to vector<16x32xf32>
    %22 = arith.mulf %19, %21 : vector<16x32xf32>
    %c0_7 = arith.constant 0 : index
    %c0_8 = arith.constant 0 : index
    %23 = vector.load %arg3[%c0_7, %c0_8] : memref<1x32xf32, #tpu.memory_space<vmem>>, vector<1x32xf32>
    %24 = vector.broadcast %23 : vector<1x32xf32> to vector<16x32xf32>
    %25 = arith.addf %22, %24 : vector<16x32xf32>
    %26 = arith.truncf %25 : vector<16x32xf32> to vector<16x32xbf16>
    %c0_9 = arith.constant 0 : index
    %c0_10 = arith.constant 0 : index
    %27 = vector.load %arg4[%c0_9, %c0_10] : memref<16x32xbf16, #tpu.memory_space<vmem>>, vector<16x32xbf16>
    tpu.vector_store %arg4[%c0_9, %c0_10], %26 {strides = array<i32>} : memref<16x32xbf16, #tpu.memory_space<vmem>>, vector<16x32xbf16>,
    return
  }
  func.func @transform_0(%arg0: i32) -> (i32, i32) {
    %c0_i32 = arith.constant 0 : i32
    %c0_i32_0 = arith.constant 0 : i32
    return %arg0, %c0_i32 : i32, i32
  }
  func.func @transform_1(%arg0: i32) -> (i32, i32) {
    %c0_i32 = arith.constant 0 : i32
    %c0_i32_0 = arith.constant 0 : i32
    %c0_i32_1 = arith.constant 0 : i32
    return %c0_i32, %c0_i32_0 : i32, i32
  }
  func.func @transform_2(%arg0: i32) -> (i32, i32) {
    %c0_i32 = arith.constant 0 : i32
    %c0_i32_0 = arith.constant 0 : i32
    %c0_i32_1 = arith.constant 0 : i32
    return %c0_i32, %c0_i32_0 : i32, i32
  }
  func.func @transform_3(%arg0: i32) -> (i32, i32) {
    %c0_i32 = arith.constant 0 : i32
    %c0_i32_0 = arith.constant 0 : i32
    return %arg0, %c0_i32 : i32, i32
  }
}

</mosaic_0001>

<llo_original>
// kernel: tpu_custom_call.1
$region0: #{tpu_custom_call.1}
  #allocation0 [shape = 'u32[]', space=smem, size = 0x4, offset = 0x4, fixed_abs, tag = 'smem constant byte address 0x4 - core index']
  #allocation1 [shape = 'u32[144,128]{1,0:T(1,128)}', space=vmem, size = 0x12000, scoped, tag = 'internal scratch']
  %s0 = inlined_call_operand.hbm [shape: bf16[16,32], index: 0, kind: input, shape index: {}]
  %s1 = inlined_call_operand.vmem [shape: f32[1,32], index: 1, kind: input, shape index: {}]
  %s2 = inlined_call_operand.vmem [shape: f32[1,32], index: 2, kind: input, shape index: {}]
  %s3 = inlined_call_operand.hbm [shape: bf16[16,32], index: 3, kind: output, shape index: {}]
  %s4 = sld [smem:[#allocation0]]
  $region26: #{tpu_custom_call.1} parent=0
    _
  %s6 = ssub.s32 1, %s4
  %s7 = scalar_select 0, %s6, %s4
  $region1: #{tpu_custom_call.1} parent=0
    #allocation2 [shape = 'u8[4096]{0}', space=vmem, size = 0x1000, scoped, tag = 'input window, operand 0, single buffered']
    #allocation3 [shape = 's32[1]{0}', space=sflag, size = 0x4, scoped, tag = 'scoped memory for tpu_custom_call.1']
    #allocation4 [shape = 's32[1]{0}', space=sflag, size = 0x4, scoped, tag = 'scoped memory for tpu_custom_call.1']
    #allocation5 [shape = 'u8[4096]{0}', space=vmem, size = 0x1000, scoped, tag = 'output window, operand 0, single buffered']
    %8 = vsyncpa [#allocation3], 0
    %9 = vsyncpa [#allocation4], 0
    // Predicated region
    $region2: #{tpu_custom_call.1} parent=1 // pred_check
      _
    $region3: #{tpu_custom_call.1} parent=1 // pred_check_branch
      %11 = sbr.rel (0) target = $region5
    $region4: #{tpu_custom_call.1} parent=1 // pred_region
      %s13 = ssub.s32 128, 128
      %14 = vsyncadd [#allocation3], %s13
      %s15 = sshll.u32 [#allocation2], 4
      %s16 = int_to_ptr.vmem [resolvable:$true] %s15
      %21 = dma.hbm_to_vmem [thread:$0]  %s0, 128, %s16, [#allocation3], 64, 64, 4
    $region5: #{tpu_custom_call.1} parent=1 // pred_fallthru
      _
    // Predicated region
    $region6: #{tpu_custom_call.1} parent=1 // pred_check
      _
    $region7: #{tpu_custom_call.1} parent=1 // pred_check_branch
      %23 = sbr.rel (0) target = $region9
    $region8: #{tpu_custom_call.1} parent=1 // pred_region
      _
    $region9: #{tpu_custom_call.1} parent=1 // pred_fallthru
      _
    // Predicated region
    $region10: #{tpu_custom_call.1} parent=1 // pred_check
      _
    $region11: #{tpu_custom_call.1} parent=1 // pred_check_branch
      %25 = sbr.rel (0) target = $region13
    $region12: #{tpu_custom_call.1} parent=1 // pred_region
      _
    $region13: #{tpu_custom_call.1} parent=1 // pred_fallthru
      _
    // Predicated region
    $region14: #{tpu_custom_call.1} parent=1 // pred_check
      _
    $region15: #{tpu_custom_call.1} parent=1 // pred_check_branch
      %27 = sbr.rel (0) target = $region17
    $region16: #{tpu_custom_call.1} parent=1 // pred_region
      %28 = dma.done [#allocation3], 128
    $region17: #{tpu_custom_call.1} parent=1 // pred_fallthru
      _
    %v29 = vld [vmem:[#allocation2] sm:$0xf]
    %v30 = vld [vmem:[#allocation2 + $0x4] sm:$0xf]
    %v31 = vunpack.c.l.bf16 %v29
    %v32 = vunpack.c.l.bf16 %v30
    %vm33 = vcmask 261120
    %v34 = vsel %vm33, %v31, 0.0
    %35 = vadd.xlane.f32.xlu0 %v34
    %v36 = vpop.xlane.xlu0 %35
    %v37 = vsel %vm33, %v32, 0.0
    %38 = vadd.xlane.f32.xlu0 %v37
    %v39 = vpop.xlane.xlu0 %38
    %v40 = vrcp.pop 32.0
    %v41 = vmul.f32 %v36, %v40
    %v42 = vmul.f32 %v39, %v40
    %v43 = vsub.f32 %v31, %v41
    %v44 = vsub.f32 %v32, %v42
    %v45 = vmul.f32 %v43, %v43
    %v46 = vmul.f32 %v44, %v44
    %v47 = vsel %vm33, %v45, 0.0
    %48 = vadd.xlane.f32.xlu0 %v47
    %v49 = vpop.xlane.xlu0 %48
    %v50 = vsel %vm33, %v46, 0.0
    %51 = vadd.xlane.f32.xlu0 %v50
    %v52 = vpop.xlane.xlu0 %51
    %v53 = vmul.f32 %v49, %v40
    %v54 = vmul.f32 %v52, %v40
    %v55 = vadd.f32 %v53, 1e-12
    %v56 = vadd.f32 %v54, 1e-12
    %v57 = vrsqrt.pop %v55
    %v58 = vrsqrt.pop %v56
    %v59 = vmul.f32 %v43, %v57
    %v60 = vmul.f32 %v44, %v58
    %v61 = vld [vmem:[%s1] sm:$0x1]
    %v63 = vlaneseq
    %v64 = vshrl.u32 %v63, 7
    %v65 = vsub.s32 0, %v64
    %v66 = vrot.slane %v61, %v65
    %v68 = vmul.f32 %v59, %v66
    %v69 = vmul.f32 %v60, %v66
    %v70 = vld [vmem:[%s2] sm:$0x1]
    %v72 = vlaneseq
    %v73 = vshrl.u32 %v72, 7
    %v74 = vsub.s32 0, %v73
    %v75 = vrot.slane %v70, %v74
    %v77 = vadd.f32 %v68, %v75
    %v78 = vadd.f32 %v69, %v75
    %v79 = vpack.c.bf16 %v78, %v77
    %v81 = vunpack.c.l.b16 %v79
    %v82 = vunpack.c.h.b16 %v79
    %v83 = vpack.c.b16 %v81, %v81
    %v84 = vpack.c.b16 %v82, %v82
    %vm87 = vcmask 257024
    %88 = vst.msk [vmem:[#allocation5] sm:$0xf] %vm87, %v83
    %89 = vst.msk [vmem:[#allocation5 + $0x4] sm:$0xf] %vm87, %v84
    // Predicated region
    $region18: #{tpu_custom_call.1} parent=1 // pred_check
      _
    $region19: #{tpu_custom_call.1} parent=1 // pred_check_branch
      %91 = sbr.rel (0) target = $region21
    $region20: #{tpu_custom_call.1} parent=1 // pred_region
      %s93 = ssub.s32 128, 128
      %94 = vsyncadd [#allocation4], %s93
      %s95 = sshll.u32 [#allocation5], 4
      %s96 = int_to_ptr.vmem [resolvable:$true] %s95
      %101 = dma.vmem_to_hbm [thread:$0]  %s96, 128, %s3, [#allocation4], 64, 64, 4
    $region21: #{tpu_custom_call.1} parent=1 // pred_fallthru
      _
    // Predicated region
    $region22: #{tpu_custom_call.1} parent=1 // pred_check
      _
    $region23: #{tpu_custom_call.1} parent=1 // pred_check_branch
      %103 = sbr.rel (0) target = $region25
    $region24: #{tpu_custom_call.1} parent=1 // pred_region
      %104 = dma.done [#allocation4], 128
    $region25: #{tpu_custom_call.1} parent=1 // pred_fallthru
      _
    %105 = vsyncpa [#allocation3], 1
    %106 = vsyncpa [#allocation4], 1

</llo_original>
